<compile_context>
chip_gen: v6e
topology: v6e:2x2x1
jax: 0.10.0
libtpu: 0.0.40
codegen_flags: <defaults>
</compile_context>

<pallas_src>
import functools

import jax
import jax.numpy as jnp
import numpy as np
from jax import lax
from jax.experimental import pallas as pl
from jax.experimental.pallas import tpu as pltpu

_LANE = 128


def _elu(v):
    # ELU(alpha=1).  exp runs on the EUP slot; the select rides the VPU.
    return jnp.where(v > 0, v, jnp.exp(v) - 1.0)


def _round_up(v, m):
    return -(-v // m) * m


# ----------------------------------------------------------------------------------
# Kernel
# ----------------------------------------------------------------------------------
def temporal_block_kernel(x_ref, w1s_ref, w2s_ref, wd_ref,
                          scale_ref, shift1_ref, shift2_ref, bd_ref,
                          out_ref, xhalo_ref, hhalo_ref,
                          *, K, dil, pad, Lt, NB, per_tap1, per_tap2, use_downsample):
    """Grid = (batch blocks, L tiles).  NCL layout, L on lanes.

    x_ref      : (NB, Cin, Lt)    bf16 input tile
    w1s_ref    : (Cout, K*Cin)    bf16 conv1 weights, taps stacked on contraction
    w2s_ref    : (Cout, K*Cout)   bf16 conv2 weights
    wd_ref     : (Cout, Cin)      bf16 1x1 downsample conv (unused if identity residual)
    scale_ref  : (Cout, 1)        f32 folded BatchNorm (eval) scale
    shift1_ref : (Cout, 1)        f32 b1*scale + bn_shift   (conv bias folded in)
    shift2_ref : (Cout, 1)        f32 b2*scale + bn_shift
    bd_ref     : (Cout, 1)        f32 downsample bias
    out_ref    : (NB, Cout, Lt)   output tile (bf16 by default)
    xhalo_ref  : (NB, Cin, pad)   causal halo of x carried across L tiles
    hhalo_ref  : (NB, Cout, pad)  causal halo of the conv1 output carried across L tiles
    """
    j = pl.program_id(1)
    cin = x_ref.shape[1]
    cout = out_ref.shape[1]

    if pad > 0:
        # Start of a batch block's L sweep: the causal history left of tile 0 is zero.
        @pl.when(j == 0)
        def _():
            xhalo_ref[...] = jnp.zeros_like(xhalo_ref)
            hhalo_ref[...] = jnp.zeros_like(hhalo_ref)

    # Hoisted parameter loads and lane broadcasts (JAX does not CSE broadcast_in_dim,
    # so these must live outside the batch loop).
    w1s = w1s_ref[...]
    w2s = w2s_ref[...]
    scale_b = jnp.broadcast_to(scale_ref[...], (cout, Lt))
    shift1_b = jnp.broadcast_to(shift1_ref[...], (cout, Lt))
    shift2_b = jnp.broadcast_to(shift2_ref[...], (cout, Lt))
    if use_downsample:
        wd = wd_ref[...]
        bd_b = jnp.broadcast_to(bd_ref[...], (cout, Lt))

    def causal_conv(xw, w_s, c, per_tap):
        # xw : (c, pad + Lt) bf16 window = [halo | current tile]; w_s : (Cout, K*c).
        if per_tap:
            # Large contraction: K accumulating MXU matmuls, no (K*c, Lt) staging
            # operand (maps to in-place MRB accumulation on v7x).
            acc = jnp.dot(w_s[:, :c], xw[:, :Lt], preferred_element_type=jnp.float32)
            for k in range(1, K):
                acc = acc + jnp.dot(w_s[:, k * c:(k + 1) * c],
                                    xw[:, k * dil:k * dil + Lt],
                                    preferred_element_type=jnp.float32)
            return acc
        # Small contraction: stack the K dilated tap windows on the contraction
        # (sublane) axis and hit the MXU once (keeps the tiny-C case MXU-occupied).
        if K == 1:
            xs = xw[:, :Lt]
        else:
            xs = jnp.concatenate([xw[:, k * dil:k * dil + Lt] for k in range(K)], axis=0)
        return jnp.dot(w_s, xs, preferred_element_type=jnp.float32)

    def body(nb, carry):
        x = x_ref[nb]                                        # (Cin, Lt) bf16
        if pad > 0:
            xw = jnp.concatenate([xhalo_ref[nb], x], axis=-1)
            xhalo_ref[nb] = x[:, Lt - pad:Lt]                # history for next L tile
        else:
            xw = x

        # conv1 -> bn1 (eval, folded; conv bias folded into shift) -> ELU -> dropout(id)
        h1 = _elu(causal_conv(xw, w1s, cin, per_tap1) * scale_b + shift1_b)
        h1b = h1.astype(w2s.dtype)

        if pad > 0:
            hw = jnp.concatenate([hhalo_ref[nb], h1b], axis=-1)
            hhalo_ref[nb] = h1b[:, Lt - pad:Lt]
        else:
            hw = h1b

        # conv2 -> bn1 AGAIN (the module's Sequential reuses bn1; bn2 is never used)
        h2 = _elu(causal_conv(hw, w2s, cout, per_tap2) * scale_b + shift2_b)

        # residual: learned 1x1 conv when Cin != Cout, identity otherwise.
        # (bf16 operands; tolerance-checked against the f32 reference.)
        if use_downsample:
            res = jnp.dot(wd, x, preferred_element_type=jnp.float32) + bd_b
        else:
            res = x.astype(jnp.float32)

        out_ref[nb] = _elu(h2 + res).astype(out_ref.dtype)
        return carry

    # fori_loop (not a static Python unroll) bounds the vreg live set to ONE batch
    # element's intermediates regardless of NB.
    lax.fori_loop(0, NB, body, 0)


# ----------------------------------------------------------------------------------
# VMEM-aware tiling
# ----------------------------------------------------------------------------------
def _vmem_budget_bytes():
    cap = 64 * 1024 * 1024                 # conservative fallback: v7x per-core VMEM
    try:
        cap = int(pltpu.get_tpu_info().vmem_capacity_bytes)
    except Exception:
        pass
    # 3/4 of physical (v5e/v6e ~96 MiB, v7x 48 MiB), capped to leave compiler headroom.
    return min((cap * 3) // 4, 100 * 1024 * 1024)


def _block_bytes_per_col(Cin, Cout, K, out_itemsize):
    # Double-buffered in/out pipeline blocks per (batch element, L column).
    pipe = 2 * (2 * Cin) + 2 * (out_itemsize * Cout)
    # In-kernel working set per L column (one batch element live thanks to fori_loop):
    # f32 acc + f32 h1 + bf16 stacked-tap operand.
    work = 8 * Cout + 2 * K * max(Cin, Cout)
    return pipe, work


def _choose_l_tile(L, pad, pipe_col, work_col, budget):
    l128 = _round_up(max(L, 1), _LANE)
    lt_min = max(_LANE, _round_up(max(pad, 1), _LANE))       # tile must cover the halo
    cap = (budget // 3) // max(pipe_col + work_col, 1)        # single-elem block <= 1/3 budget
    cap = max(_LANE, (cap // _LANE) * _LANE)
    lt_cap = max(lt_min, min(cap, 4096))                      # diminishing returns past ~4k lanes
    n_tiles = max(1, -(-l128 // lt_cap))
    return max(lt_min, _round_up(-(-l128 // n_tiles), _LANE))


def _choose_batch_block(N, Lt, pipe_col, work_col, budget):
    def fits(nb):
        return nb * Lt * pipe_col + Lt * work_col <= (2 * budget) // 3
    # Prefer >= 4 steps on the parallel batch axis so both v7x TensorCores get a
    # pipelined stream; fall back to >= 2, then whatever divides N and fits.
    for min_steps in (4, 2, 1):
        for nb in (16, 8, 4, 2, 1):
            if N % nb == 0 and N // nb >= min_steps and fits(nb):
                return nb
    return 1


# ----------------------------------------------------------------------------------
# Wrapper
# ----------------------------------------------------------------------------------
def temporal_block(x_ncl, params, *, kernel_size, dilation,
                   out_dtype=jnp.bfloat16, batch_block=None, l_tile=None,
                   per_tap=None):
    """x_ncl: (N, C_in, L) float32 in PyTorch Conv1d layout -> (N, C_out, L) out_dtype."""
    N, Cin, L = x_ncl.shape
    K = kernel_size
    pad = (K - 1) * dilation
    Cout = params["w1s"].shape[0]
    use_downsample = "wd" in params
    if not use_downsample:
        assert Cin == Cout, "identity residual requires n_inputs == n_outputs"

    out_isz = jnp.dtype(out_dtype).itemsize
    budget = _vmem_budget_bytes()
    pipe_col, work_col = _block_bytes_per_col(Cin, Cout, K, out_isz)

    Lt = l_tile or _choose_l_tile(L, pad, pipe_col, work_col, budget)
    assert Lt % _LANE == 0 and Lt >= pad, (Lt, pad)
    NB = batch_block or _choose_batch_block(N, Lt, pipe_col, work_col, budget)
    assert N % NB == 0, (N, NB)
    Lp = _round_up(max(L, Lt), Lt)

    per_tap1 = (Cin >= 128) if per_tap is None else per_tap
    per_tap2 = (Cout >= 128) if per_tap is None else per_tap

    # bf16 activations halve HBM input bytes and feed the MXU at bf16 rate (f32 acc);
    # L is padded up to a multiple of the lane tile -> every output store is lane-dense.
    x_bf = x_ncl.astype(jnp.bfloat16)
    if Lp != L:
        x_bf = jnp.pad(x_bf, ((0, 0), (0, 0), (0, Lp - L)))

    wd = params["wd"] if use_downsample else jnp.zeros((Cout, Cin), jnp.bfloat16)
    bd = params["bd"] if use_downsample else jnp.zeros((Cout, 1), jnp.float32)

    kern = functools.partial(
        temporal_block_kernel, K=K, dil=dilation, pad=pad, Lt=Lt, NB=NB,
        per_tap1=per_tap1, per_tap2=per_tap2, use_downsample=use_downsample)

    def rep(shape):
        nd = len(shape)
        return pl.BlockSpec(shape, lambda n, j: (0,) * nd)    # replicated across grid

    halo = max(pad, 1)
    out = pl.pallas_call(
        kern,
        out_shape=jax.ShapeDtypeStruct((N, Cout, Lp), out_dtype),
        grid_spec=pltpu.PrefetchScalarGridSpec(
            num_scalar_prefetch=0,
            grid=(N // NB, Lp // Lt),
            in_specs=[
                pl.BlockSpec((NB, Cin, Lt), lambda n, j: (n, 0, j)),   # x (NCL)
                rep((Cout, K * Cin)),                                   # conv1 stacked
                rep((Cout, K * Cout)),                                  # conv2 stacked
                rep((Cout, Cin)),                                       # 1x1 downsample
                rep((Cout, 1)),                                         # bn scale
                rep((Cout, 1)),                                         # shift1
                rep((Cout, 1)),                                         # shift2
                rep((Cout, 1)),                                         # downsample bias
            ],
            out_specs=pl.BlockSpec((NB, Cout, Lt), lambda n, j: (n, 0, j)),
            scratch_shapes=[
                pltpu.VMEM((NB, Cin, halo), jnp.bfloat16),   # x causal halo carry
                pltpu.VMEM((NB, Cout, halo), jnp.bfloat16),  # conv1-output halo carry
            ],
        ),
        compiler_params=pltpu.CompilerParams(
            dimension_semantics=("parallel", "arbitrary"),
            vmem_limit_bytes=budget),
    )(x_bf, params["w1s"], params["w2s"], wd,
      params["bn_scale"], params["shift1"], params["shift2"], bd)

    return out[:, :, :L] if Lp != L else out


# ----------------------------------------------------------------------------------
# Parameter packing + pure-JAX reference
# ----------------------------------------------------------------------------------
def pack_params(raw):
    """Fold eval-mode BN into scale/shift (conv biases folded in) and stack conv taps."""
    Cout = raw["w1_oik"].shape[0]
    bn_scale = raw["gamma"] / jnp.sqrt(raw["running_var"] + 1e-5)
    bn_shift = raw["beta"] - raw["running_mean"] * bn_scale
    p = {
        "w1s": jnp.transpose(raw["w1_oik"], (0, 2, 1)).reshape(Cout, -1)
                  .astype(jnp.bfloat16),
        "w2s": jnp.transpose(raw["w2_oik"], (0, 2, 1)).reshape(Cout, -1)
                  .astype(jnp.bfloat16),
        "bn_scale": bn_scale.reshape(Cout, 1),
        "shift1": (raw["b1"] * bn_scale + bn_shift).reshape(Cout, 1),
        "shift2": (raw["b2"] * bn_scale + bn_shift).reshape(Cout, 1),
    }
    if "wd_oik" in raw:
        p["wd"] = raw["wd_oik"][:, :, 0].astype(jnp.bfloat16)
        p["bd"] = raw["bd"].reshape(Cout, 1)
    return p


def reference(x_ncl, raw, *, kernel_size, dilation):
    """Pure-JAX f32 reference (lax.conv), PyTorch NCL layout throughout."""
    pad = (kernel_size - 1) * dilation
    bn_scale = raw["gamma"] / jnp.sqrt(raw["running_var"] + 1e-5)
    bn_shift = raw["beta"] - raw["running_mean"] * bn_scale

    def causal_conv(h, w_oik, b):
        y = lax.conv_general_dilated(
            h, w_oik, window_strides=(1,), padding=[(pad, pad)],
            rhs_dilation=(dilation,), dimension_numbers=("NCH", "OIH", "NCH"),
            precision=lax.Precision.HIGHEST)
        y = y + b[None, :, None]
        return y[:, :, :-pad] if pad > 0 else y               # Chomp1d

    def bn(h):
        return h * bn_scale[None, :, None] + bn_shift[None, :, None]

    h = _elu(bn(causal_conv(x_ncl, raw["w1_oik"], raw["b1"])))   # dropout = id
    h = _elu(bn(causal_conv(h, raw["w2_oik"], raw["b2"])))       # bn1 reused (module quirk)
    if "wd_oik" in raw:
        res = jnp.einsum("ncl,oc->nol", x_ncl, raw["wd_oik"][:, :, 0],
                         precision=lax.Precision.HIGHEST) + raw["bd"][None, :, None]
    else:
        res = x_ncl
    return _elu(h + res)


# ----------------------------------------------------------------------------------
# Tests
# ----------------------------------------------------------------------------------
if __name__ == "__main__":

    def make_raw(key, Cin, Cout, K, *, downsample):
        ks = jax.random.split(key, 10)
        raw = {
            "w1_oik": jax.random.normal(ks[0], (Cout, Cin, K), jnp.float32) * 0.3,
            "b1": jax.random.normal(ks[1], (Cout,), jnp.float32) * 0.1,
            "w2_oik": jax.random.normal(ks[2], (Cout, Cout, K), jnp.float32) * 0.2,
            "b2": jax.random.normal(ks[3], (Cout,), jnp.float32) * 0.1,
            "gamma": 1.0 + 0.1 * jax.random.normal(ks[4], (Cout,), jnp.float32),
            "beta": 0.1 * jax.random.normal(ks[5], (Cout,), jnp.float32),
            "running_mean": 0.1 * jax.random.normal(ks[6], (Cout,), jnp.float32),
            "running_var": 1.0 + jax.random.uniform(ks[7], (Cout,), jnp.float32),
        }
        if downsample:
            raw["wd_oik"] = jax.random.normal(ks[8], (Cout, Cin, 1), jnp.float32) * 0.3
            raw["bd"] = jax.random.normal(ks[9], (Cout,), jnp.float32) * 0.1
        return raw

    def check(name, *, N, Cin, Cout, L, K, dil, **kw):
        kraw, kx = jax.random.split(jax.random.PRNGKey(0))
        raw = make_raw(kraw, Cin, Cout, K, downsample=(Cin != Cout))
        params = pack_params(raw)
        x = jax.random.normal(kx, (N, Cin, L), jnp.float32)

        out = jax.block_until_ready(
            temporal_block(x, params, kernel_size=K, dilation=dil, **kw))
        ref = reference(x, raw, kernel_size=K, dilation=dil)
        assert out.shape == (N, Cout, L), (name, out.shape)

        o = np.asarray(out.astype(jnp.float32))
        r = np.asarray(ref)
        err = float(np.max(np.abs(o - r)))
        # Tolerance sized for bf16 operands / bf16 output with f32 MXU accumulation.
        tol = 3e-2 + 3e-2 * float(np.max(np.abs(r)))
        assert err <= tol, (name, err, tol)

    # 1) Base config (n_inputs=4, n_outputs=8, kernel_size=3, dilation=4,
    #    padding=(K-1)*dilation) — learned 1x1 downsample residual.
    check("base", N=2, Cin=4, Cout=8, L=16, K=3, dil=4)

    # 2) Multi L-tile path: 128-wide lane tiles with the causal halos carried across
    #    tiles, plus an NB=2 batch block iterated with fori_loop.
    check("l_tiled", N=4, Cin=4, Cout=8, L=200, K=3, dil=4, l_tile=128, batch_block=2)

    # 3) Identity-residual variant (n_inputs == n_outputs -> downsample=None) with the
    #    per-tap accumulating-matmul branch forced on (auto-enabled when C >= 128).
    check("per_tap_identity", N=2, Cin=8, Cout=8, L=40, K=3, dil=2, per_tap=True)

    # TODO(synk): Dropout / BatchNorm training-mode (stochastic mask, batch statistics)
    # are not implemented; the kernel reproduces eval-mode semantics.
    print("KERNEL_OK")
</pallas_src>

<mosaic_0001>
module attributes {stable_mosaic.version = 11 : i64} {
  func.func @temporal_block_kernel(%arg0: i32, %arg1: i32, %arg2: memref<1x4x128xbf16, #tpu.memory_space<vmem>>, %arg3: memref<8x12xbf16, #tpu.memory_space<vmem>>, %arg4: memref<8x24xbf16, #tpu.memory_space<vmem>>, %arg5: memref<8x4xbf16, #tpu.memory_space<vmem>>, %arg6: memref<8x1xf32, #tpu.memory_space<vmem>>, %arg7: memref<8x1xf32, #tpu.memory_space<vmem>>, %arg8: memref<8x1xf32, #tpu.memory_space<vmem>>, %arg9: memref<8x1xf32, #tpu.memory_space<vmem>>, %arg10: memref<1x8x128xbf16, #tpu.memory_space<vmem>>, %arg11: memref<1x4x8xbf16, #tpu.memory_space<vmem>>, %arg12: memref<1x8x8xbf16, #tpu.memory_space<vmem>>) attributes {dimension_semantics = [#tpu.dimension_semantics<parallel>, #tpu.dimension_semantics<arbitrary>], iteration_bounds = array<i64: 2, 1>, scalar_prefetch = 0 : i64, scratch_operands = 2 : i64, tpu.core_type = #tpu.core_type<tc>, window_params = [{transform_indices = @transform_0, window_bounds = array<i64: 1, 4, 128>}, {pipeline_mode = #tpu.pipeline_mode<synchronous>, transform_indices = @transform_1, window_bounds = array<i64: 8, 12>}, {pipeline_mode = #tpu.pipeline_mode<synchronous>, transform_indices = @transform_2, window_bounds = array<i64: 8, 24>}, {pipeline_mode = #tpu.pipeline_mode<synchronous>, transform_indices = @transform_3, window_bounds = array<i64: 8, 4>}, {pipeline_mode = #tpu.pipeline_mode<synchronous>, transform_indices = @transform_4, window_bounds = array<i64: 8, 1>}, {pipeline_mode = #tpu.pipeline_mode<synchronous>, transform_indices = @transform_5, window_bounds = array<i64: 8, 1>}, {pipeline_mode = #tpu.pipeline_mode<synchronous>, transform_indices = @transform_6, window_bounds = array<i64: 8, 1>}, {pipeline_mode = #tpu.pipeline_mode<synchronous>, transform_indices = @transform_7, window_bounds = array<i64: 8, 1>}, {transform_indices = @transform_8, window_bounds = array<i64: 1, 8, 128>}]} {
    %c0_i32 = arith.constant 0 : i32
    %0 = arith.cmpi eq, %arg1, %c0_i32 : i32
    %1 = arith.extui %0 : i1 to i32
    %c0_i32_0 = arith.constant 0 : i32
    %2 = arith.cmpi ne, %1, %c0_i32_0 : i32
    scf.if %2 {
      %cst_35 = arith.constant 0.000000e+00 : bf16
      %80 = vector.broadcast %cst_35 : bf16 to vector<1x4x8xbf16>
      %c0_36 = arith.constant 0 : index
      %c0_37 = arith.constant 0 : index
      %c0_38 = arith.constant 0 : index
      %81 = vector.load %arg11[%c0_36, %c0_37, %c0_38] : memref<1x4x8xbf16, #tpu.memory_space<vmem>>, vector<1x4x8xbf16>
      tpu.vector_store %arg11[%c0_36, %c0_37, %c0_38], %80 {strides = array<i32>} : memref<1x4x8xbf16, #tpu.memory_space<vmem>>, vector<1x4x8xbf16>,
      %cst_39 = arith.constant 0.000000e+00 : bf16
      %82 = vector.broadcast %cst_39 : bf16 to vector<1x8x8xbf16>
      %c0_40 = arith.constant 0 : index
      %c0_41 = arith.constant 0 : index
      %c0_42 = arith.constant 0 : index
      %83 = vector.load %arg12[%c0_40, %c0_41, %c0_42] : memref<1x8x8xbf16, #tpu.memory_space<vmem>>, vector<1x8x8xbf16>
      tpu.vector_store %arg12[%c0_40, %c0_41, %c0_42], %82 {strides = array<i32>} : memref<1x8x8xbf16, #tpu.memory_space<vmem>>, vector<1x8x8xbf16>,
    } else {
    }
    %c0 = arith.constant 0 : index
    %c0_1 = arith.constant 0 : index
    %3 = vector.load %arg3[%c0, %c0_1] : memref<8x12xbf16, #tpu.memory_space<vmem>>, vector<8x12xbf16>
    %c0_2 = arith.constant 0 : index
    %c0_3 = arith.constant 0 : index
    %4 = vector.load %arg4[%c0_2, %c0_3] : memref<8x24xbf16, #tpu.memory_space<vmem>>, vector<8x24xbf16>
    %c0_4 = arith.constant 0 : index
    %c0_5 = arith.constant 0 : index
    %5 = vector.load %arg6[%c0_4, %c0_5] : memref<8x1xf32, #tpu.memory_space<vmem>>, vector<8x1xf32>
    %6 = vector.shape_cast %5 : vector<8x1xf32> to vector<8x1xf32>
    %7 = vector.broadcast %6 : vector<8x1xf32> to vector<8x128xf32>
    %c0_6 = arith.constant 0 : index
    %c0_7 = arith.constant 0 : index
    %8 = vector.load %arg7[%c0_6, %c0_7] : memref<8x1xf32, #tpu.memory_space<vmem>>, vector<8x1xf32>
    %9 = vector.shape_cast %8 : vector<8x1xf32> to vector<8x1xf32>
    %10 = vector.broadcast %9 : vector<8x1xf32> to vector<8x128xf32>
    %c0_8 = arith.constant 0 : index
    %c0_9 = arith.constant 0 : index
    %11 = vector.load %arg8[%c0_8, %c0_9] : memref<8x1xf32, #tpu.memory_space<vmem>>, vector<8x1xf32>
    %12 = vector.shape_cast %11 : vector<8x1xf32> to vector<8x1xf32>
    %13 = vector.broadcast %12 : vector<8x1xf32> to vector<8x128xf32>
    %c0_10 = arith.constant 0 : index
    %c0_11 = arith.constant 0 : index
    %14 = vector.load %arg5[%c0_10, %c0_11] : memref<8x4xbf16, #tpu.memory_space<vmem>>, vector<8x4xbf16>
    %c0_12 = arith.constant 0 : index
    %c0_13 = arith.constant 0 : index
    %15 = vector.load %arg9[%c0_12, %c0_13] : memref<8x1xf32, #tpu.memory_space<vmem>>, vector<8x1xf32>
    %16 = vector.shape_cast %15 : vector<8x1xf32> to vector<8x1xf32>
    %17 = vector.broadcast %16 : vector<8x1xf32> to vector<8x128xf32>
    %c0_i32_14 = arith.constant 0 : i32
    %18 = arith.index_cast %c0_i32_14 : i32 to index
    %c0_15 = arith.constant 0 : index
    %c0_16 = arith.constant 0 : index
    %19 = vector.load %arg2[%18, %c0_15, %c0_16] : memref<1x4x128xbf16, #tpu.memory_space<vmem>>, vector<1x4x128xbf16>
    %20 = vector.shape_cast %19 : vector<1x4x128xbf16> to vector<4x128xbf16>
    %21 = arith.index_cast %c0_i32_14 : i32 to index
    %c0_17 = arith.constant 0 : index
    %c0_18 = arith.constant 0 : index
    %22 = vector.load %arg11[%21, %c0_17, %c0_18] : memref<1x4x8xbf16, #tpu.memory_space<vmem>>, vector<1x4x8xbf16>
    %23 = vector.shape_cast %22 : vector<1x4x8xbf16> to vector<4x8xbf16>
    %24 = tpu.concatenate %23, %20 in 1 : vector<4x8xbf16>, vector<4x128xbf16> -> vector<4x136xbf16>
    %25 = vector.extract_strided_slice %20 {offsets = [0, 120], sizes = [4, 8], strides = [1, 1]} : vector<4x128xbf16> to vector<4x8xbf16>
    %26 = arith.index_cast %c0_i32_14 : i32 to index
    %c0_19 = arith.constant 0 : index
    %c0_20 = arith.constant 0 : index
    %27 = vector.load %arg11[%26, %c0_19, %c0_20] : memref<1x4x8xbf16, #tpu.memory_space<vmem>>, vector<1x4x8xbf16>
    %28 = vector.shape_cast %27 : vector<1x4x8xbf16> to vector<4x8xbf16>
    %29 = vector.shape_cast %25 : vector<4x8xbf16> to vector<1x4x8xbf16>
    tpu.vector_store %arg11[%26, %c0_19, %c0_20], %29 {strides = array<i32>} : memref<1x4x8xbf16, #tpu.memory_space<vmem>>, vector<1x4x8xbf16>,
    %30 = vector.extract_strided_slice %24 {offsets = [0, 0], sizes = [4, 128], strides = [1, 1]} : vector<4x136xbf16> to vector<4x128xbf16>
    %31 = vector.extract_strided_slice %24 {offsets = [0, 4], sizes = [4, 128], strides = [1, 1]} : vector<4x136xbf16> to vector<4x128xbf16>
    %32 = vector.extract_strided_slice %24 {offsets = [0, 8], sizes = [4, 128], strides = [1, 1]} : vector<4x136xbf16> to vector<4x128xbf16>
    %33 = tpu.concatenate %30, %31, %32 in 0 : vector<4x128xbf16>, vector<4x128xbf16>, vector<4x128xbf16> -> vector<12x128xbf16>
    %cst = arith.constant dense<0.000000e+00> : vector<8x128xf32>
    %34 = tpu.matmul %3, %33, %cst {dimension_numbers = #tpu.dot_dimension_numbers<[1], [0], [0], [1], [0, 0, 1, 1], [], []>} : vector<8x12xbf16>, vector<12x128xbf16>, vector<8x128xf32> -> vector<8x128xf32>
    %35 = arith.mulf %34, %7 : vector<8x128xf32>
    %36 = arith.addf %35, %10 : vector<8x128xf32>
    %cst_21 = arith.constant 0.000000e+00 : f32
    %37 = vector.broadcast %cst_21 : f32 to vector<8x128xf32>
    %38 = arith.cmpf ogt, %36, %37 : vector<8x128xf32>
    %39 = math.exp %36 : vector<8x128xf32>
    %cst_22 = arith.constant 1.000000e+00 : f32
    %40 = vector.broadcast %cst_22 : f32 to vector<8x128xf32>
    %41 = arith.subf %39, %40 : vector<8x128xf32>
    %42 = arith.select %38, %36, %41 : vector<8x128xi1>, vector<8x128xf32>
    %43 = arith.truncf %42 : vector<8x128xf32> to vector<8x128xbf16>
    %44 = arith.index_cast %c0_i32_14 : i32 to index
    %c0_23 = arith.constant 0 : index
    %c0_24 = arith.constant 0 : index
    %45 = vector.load %arg12[%44, %c0_23, %c0_24] : memref<1x8x8xbf16, #tpu.memory_space<vmem>>, vector<1x8x8xbf16>
    %46 = vector.shape_cast %45 : vector<1x8x8xbf16> to vector<8x8xbf16>
    %47 = tpu.concatenate %46, %43 in 1 : vector<8x8xbf16>, vector<8x128xbf16> -> vector<8x136xbf16>
    %48 = vector.extract_strided_slice %43 {offsets = [0, 120], sizes = [8, 8], strides = [1, 1]} : vector<8x128xbf16> to vector<8x8xbf16>
    %49 = arith.index_cast %c0_i32_14 : i32 to index
    %c0_25 = arith.constant 0 : index
    %c0_26 = arith.constant 0 : index
    %50 = vector.load %arg12[%49, %c0_25, %c0_26] : memref<1x8x8xbf16, #tpu.memory_space<vmem>>, vector<1x8x8xbf16>
    %51 = vector.shape_cast %50 : vector<1x8x8xbf16> to vector<8x8xbf16>
    %52 = vector.shape_cast %48 : vector<8x8xbf16> to vector<1x8x8xbf16>
    tpu.vector_store %arg12[%49, %c0_25, %c0_26], %52 {strides = array<i32>} : memref<1x8x8xbf16, #tpu.memory_space<vmem>>, vector<1x8x8xbf16>,
    %53 = vector.extract_strided_slice %47 {offsets = [0, 0], sizes = [8, 128], strides = [1, 1]} : vector<8x136xbf16> to vector<8x128xbf16>
    %54 = vector.extract_strided_slice %47 {offsets = [0, 4], sizes = [8, 128], strides = [1, 1]} : vector<8x136xbf16> to vector<8x128xbf16>
    %55 = vector.extract_strided_slice %47 {offsets = [0, 8], sizes = [8, 128], strides = [1, 1]} : vector<8x136xbf16> to vector<8x128xbf16>
    %56 = tpu.concatenate %53, %54, %55 in 0 : vector<8x128xbf16>, vector<8x128xbf16>, vector<8x128xbf16> -> vector<24x128xbf16>
    %cst_27 = arith.constant dense<0.000000e+00> : vector<8x128xf32>
    %57 = tpu.matmul %4, %56, %cst_27 {dimension_numbers = #tpu.dot_dimension_numbers<[1], [0], [0], [1], [0, 0, 1, 1], [], []>} : vector<8x24xbf16>, vector<24x128xbf16>, vector<8x128xf32> -> vector<8x128xf32>
    %58 = arith.mulf %57, %7 : vector<8x128xf32>
    %59 = arith.addf %58, %13 : vector<8x128xf32>
    %cst_28 = arith.constant 0.000000e+00 : f32
    %60 = vector.broadcast %cst_28 : f32 to vector<8x128xf32>
    %61 = arith.cmpf ogt, %59, %60 : vector<8x128xf32>
    %62 = math.exp %59 : vector<8x128xf32>
    %cst_29 = arith.constant 1.000000e+00 : f32
    %63 = vector.broadcast %cst_29 : f32 to vector<8x128xf32>
    %64 = arith.subf %62, %63 : vector<8x128xf32>
    %65 = arith.select %61, %59, %64 : vector<8x128xi1>, vector<8x128xf32>
    %cst_30 = arith.constant dense<0.000000e+00> : vector<8x128xf32>
    %66 = tpu.matmul %14, %20, %cst_30 {dimension_numbers = #tpu.dot_dimension_numbers<[1], [0], [0], [1], [0, 0, 1, 1], [], []>} : vector<8x4xbf16>, vector<4x128xbf16>, vector<8x128xf32> -> vector<8x128xf32>
    %67 = arith.addf %66, %17 : vector<8x128xf32>
    %68 = arith.addf %65, %67 : vector<8x128xf32>
    %cst_31 = arith.constant 0.000000e+00 : f32
    %69 = vector.broadcast %cst_31 : f32 to vector<8x128xf32>
    %70 = arith.cmpf ogt, %68, %69 : vector<8x128xf32>
    %71 = math.exp %68 : vector<8x128xf32>
    %cst_32 = arith.constant 1.000000e+00 : f32
    %72 = vector.broadcast %cst_32 : f32 to vector<8x128xf32>
    %73 = arith.subf %71, %72 : vector<8x128xf32>
    %74 = arith.select %70, %68, %73 : vector<8x128xi1>, vector<8x128xf32>
    %75 = arith.truncf %74 : vector<8x128xf32> to vector<8x128xbf16>
    %76 = arith.index_cast %c0_i32_14 : i32 to index
    %c0_33 = arith.constant 0 : index
    %c0_34 = arith.constant 0 : index
    %77 = vector.load %arg10[%76, %c0_33, %c0_34] : memref<1x8x128xbf16, #tpu.memory_space<vmem>>, vector<1x8x128xbf16>
    %78 = vector.shape_cast %77 : vector<1x8x128xbf16> to vector<8x128xbf16>
    %79 = vector.shape_cast %75 : vector<8x128xbf16> to vector<1x8x128xbf16>
    tpu.vector_store %arg10[%76, %c0_33, %c0_34], %79 {strides = array<i32>} : memref<1x8x128xbf16, #tpu.memory_space<vmem>>, vector<1x8x128xbf16>,
    %c1_i32 = arith.constant 1 : i32
    return
  }
  func.func @transform_0(%arg0: i32, %arg1: i32) -> (i32, i32, i32) {
    %c0_i32 = arith.constant 0 : i32
    %c0_i32_0 = arith.constant 0 : i32
    return %arg0, %c0_i32, %arg1 : i32, i32, i32
  }
  func.func @transform_1(%arg0: i32, %arg1: i32) -> (i32, i32) {
    %c0_i32 = arith.constant 0 : i32
    %c0_i32_0 = arith.constant 0 : i32
    %c0_i32_1 = arith.constant 0 : i32
    return %c0_i32, %c0_i32_0 : i32, i32
  }
  func.func @transform_2(%arg0: i32, %arg1: i32) -> (i32, i32) {
    %c0_i32 = arith.constant 0 : i32
    %c0_i32_0 = arith.constant 0 : i32
    %c0_i32_1 = arith.constant 0 : i32
    return %c0_i32, %c0_i32_0 : i32, i32
  }
  func.func @transform_3(%arg0: i32, %arg1: i32) -> (i32, i32) {
    %c0_i32 = arith.constant 0 : i32
    %c0_i32_0 = arith.constant 0 : i32
    %c0_i32_1 = arith.constant 0 : i32
    return %c0_i32, %c0_i32_0 : i32, i32
  }
  func.func @transform_4(%arg0: i32, %arg1: i32) -> (i32, i32) {
    %c0_i32 = arith.constant 0 : i32
    %c0_i32_0 = arith.constant 0 : i32
    %c0_i32_1 = arith.constant 0 : i32
    return %c0_i32, %c0_i32_0 : i32, i32
  }
  func.func @transform_5(%arg0: i32, %arg1: i32) -> (i32, i32) {
    %c0_i32 = arith.constant 0 : i32
    %c0_i32_0 = arith.constant 0 : i32
    %c0_i32_1 = arith.constant 0 : i32
    return %c0_i32, %c0_i32_0 : i32, i32
  }
  func.func @transform_6(%arg0: i32, %arg1: i32) -> (i32, i32) {
    %c0_i32 = arith.constant 0 : i32
    %c0_i32_0 = arith.constant 0 : i32
    %c0_i32_1 = arith.constant 0 : i32
    return %c0_i32, %c0_i32_0 : i32, i32
  }
  func.func @transform_7(%arg0: i32, %arg1: i32) -> (i32, i32) {
    %c0_i32 = arith.constant 0 : i32
    %c0_i32_0 = arith.constant 0 : i32
    %c0_i32_1 = arith.constant 0 : i32
    return %c0_i32, %c0_i32_0 : i32, i32
  }
  func.func @transform_8(%arg0: i32, %arg1: i32) -> (i32, i32, i32) {
    %c0_i32 = arith.constant 0 : i32
    %c0_i32_0 = arith.constant 0 : i32
    return %arg0, %c0_i32, %arg1 : i32, i32, i32
  }
}

</mosaic_0001>

<llo_original>
// kernel: tpu_custom_call.1
$region0: #{tpu_custom_call.1}
  #allocation0 [shape = 'u32[]', space=smem, size = 0x4, offset = 0x4, fixed_abs, tag = 'smem constant byte address 0x4 - core index']
  #allocation1 [shape = 'u32[144,128]{1,0:T(1,128)}', space=vmem, size = 0x12000, scoped, tag = 'internal scratch']
  #allocation2 [shape = 'bf16[1,4,8]{2,1,0:T(4,128)(2,1)}', space=vmem, size = 0x400, scoped, tag = 'scratch operand']
  #allocation3 [shape = 'bf16[1,8,8]{2,1,0:T(8,128)(2,1)}', space=vmem, size = 0x800, scoped, tag = 'scratch operand']
  %s0 = inlined_call_operand.vmem [shape: bf16[2,4,128], index: 0, kind: input, shape index: {}]
  %s1 = inlined_call_operand.vmem [shape: bf16[8,12], index: 1, kind: input, shape index: {}]
  %s2 = inlined_call_operand.vmem [shape: bf16[8,24], index: 2, kind: input, shape index: {}]
  %s3 = inlined_call_operand.vmem [shape: bf16[8,4], index: 3, kind: input, shape index: {}]
  %s4 = inlined_call_operand.vmem [shape: f32[8,1], index: 4, kind: input, shape index: {}]
  %s5 = inlined_call_operand.vmem [shape: f32[8,1], index: 5, kind: input, shape index: {}]
  %s6 = inlined_call_operand.vmem [shape: f32[8,1], index: 6, kind: input, shape index: {}]
  %s7 = inlined_call_operand.vmem [shape: f32[8,1], index: 7, kind: input, shape index: {}]
  %s8 = inlined_call_operand.hbm [shape: bf16[2,8,128], index: 8, kind: output, shape index: {}]
  %s9 = sld [smem:[#allocation0]]
  $region69: #{tpu_custom_call.1} parent=0
    _
  %s11 = ssub.s32 1, %s9
  %s12 = scalar_select 0, %s11, %s9
  $region1: #{tpu_custom_call.1} parent=0
    #allocation4 [shape = 'u8[4096]{0}', space=vmem, size = 0x1000, scoped, tag = 'output window, operand 0']
    #allocation5 [shape = 's32[2]{0}', space=sflag, size = 0x8, scoped, tag = 'scoped memory for tpu_custom_call.1']
    %13 = vsyncpa [#allocation5], 0
    %s14 = scalar_lea.sflag [#allocation5], 1
    %15 = vsyncpa %s14, 0
    loop: start=0, step=1, limit=4
    $region2: #{tpu_custom_call.1} parent=1 // loop_pre_header
      _
    $region3: #{tpu_custom_call.1} parent=1 // loop_header
      %s17 = sphi 0, %s21
      %p18 = scmp.ge.s32.totalorder %s17, 4
      %s24 = sphi 0, %s36
      %s25 = sphi 0, %s32
      %s26 = sphi 0, %s24
      %s27 = sphi 0, %s25
      %s28 = sphi 0, %s26
      %s29 = sphi 0, %s27
      %s41 = sphi 0, %s43
      %s44 = sphi 0, %s41
      %s45 = sphi 0, %s44
      %s61 = sphi 0, %s45
      %s65 = sphi 0, %s65
      %s67 = sphi 0, %s65
      %s68 = sphi 0, %s67
      %s82 = sphi 0, %s68
      %s86 = sphi 0, %s86
      %s88 = sphi 0, %s86
      %s89 = sphi 0, %s88
      %s103 = sphi 0, %s89
      %s107 = sphi 0, %s107
      %s109 = sphi 0, %s107
      %s110 = sphi 0, %s109
      %s124 = sphi 0, %s110
      %s128 = sphi 0, %s128
      %s130 = sphi 0, %s128
      %s131 = sphi 0, %s130
      %s145 = sphi 0, %s131
      %s149 = sphi 0, %s149
      %s151 = sphi 0, %s149
      %s152 = sphi 0, %s151
      %s166 = sphi 0, %s152
      %s170 = sphi 0, %s170
      %s172 = sphi 0, %s170
      %s173 = sphi 0, %s172
      %s187 = sphi 0, %s173
      %s191 = sphi 0, %s191
      %s193 = sphi 0, %s191
      %s194 = sphi 0, %s193
      %s208 = sphi 0, %s194
      %s216 = sphi 0, %s218
      %s219 = sphi 0, %s216
      %s220 = sphi 0, %s219
      %s236 = sphi 0, %s220
    $region4: #{tpu_custom_call.1} parent=1 // loop_header_branch
      %20 = sbr.rel (%p18) target = $region8
    $region5: #{tpu_custom_call.1} parent=1 // loop_body
      %s22 = ssub.s32 %s17, 1
      %s23 = ssub.s32 %s17, 2
      %s30 = sadd.s32 1, %s25
      %p31 = scmp.ge.s32.totalorder %s30, 1
      %s32 = scalar_select %p31, 0, %s30
      %s33 = sadd.s32 1, %s24
      %s34 = scalar_select %p31, %s33, %s24
      %p35 = scmp.ge.s32.totalorder %s34, 2
      %s36 = scalar_select %p35, 0, %s34
      %s37 = ssub.s32 %s24, %s36
      %s38 = ssub.s32 %s25, %s32
      %s39 = sor.u32 %s37, %s38
      %p40 = scmp.eq.s32.totalorder %s39, 0
      %s42 = sadd.s32 %s41, 1
      %s43 = scalar_select %p40, %s41, %s42
      %p46 = pneg %p40
      %p47 = scmp.eq.s32.totalorder %s17, 1
      %p48 = por %p46, %p47
      %p49 = scmp.ne.s32.totalorder %s41, %s44
      %p50 = scmp.eq.s32.totalorder %s17, 0
      %p51 = por %p49, %p50
      %p52 = scmp.ne.s32.totalorder %s41, %s44
      %p53 = scmp.eq.s32.totalorder %s22, 1
      %p54 = por %p52, %p53
      %p55 = scmp.ne.s32.totalorder %s44, %s45
      %p56 = scmp.eq.s32.totalorder %s22, 0
      %p57 = por %p55, %p56
      %p58 = scmp.ne.s32.totalorder %s44, %s45
      %p59 = scmp.eq.s32.totalorder %s23, 1
      %p60 = por %p58, %p59
      %p62 = scmp.ne.s32.totalorder %s45, %s61
      %p63 = scmp.eq.s32.totalorder %s23, 0
      %p64 = por %p62, %p63
      %s66 = sadd.s32 %s65, 1
      %p69 = scmp.eq.s32.totalorder %s17, 1
      %p70 = scmp.ne.s32.totalorder %s65, %s67
      %p71 = scmp.eq.s32.totalorder %s17, 0
      %p72 = por %p70, %p71
      %p73 = scmp.ne.s32.totalorder %s65, %s67
      %p74 = scmp.eq.s32.totalorder %s22, 1
      %p75 = por %p73, %p74
      %p76 = scmp.ne.s32.totalorder %s67, %s68
      %p77 = scmp.eq.s32.totalorder %s22, 0
      %p78 = por %p76, %p77
      %p79 = scmp.ne.s32.totalorder %s67, %s68
      %p80 = scmp.eq.s32.totalorder %s23, 1
      %p81 = por %p79, %p80
      %p83 = scmp.ne.s32.totalorder %s68, %s82
      %p84 = scmp.eq.s32.totalorder %s23, 0
      %p85 = por %p83, %p84
      %s87 = sadd.s32 %s86, 1
      %p90 = scmp.eq.s32.totalorder %s17, 1
      %p91 = scmp.ne.s32.totalorder %s86, %s88
      %p92 = scmp.eq.s32.totalorder %s17, 0
      %p93 = por %p91, %p92
      %p94 = scmp.ne.s32.totalorder %s86, %s88
      %p95 = scmp.eq.s32.totalorder %s22, 1
      %p96 = por %p94, %p95
      %p97 = scmp.ne.s32.totalorder %s88, %s89
      %p98 = scmp.eq.s32.totalorder %s22, 0
      %p99 = por %p97, %p98
      %p100 = scmp.ne.s32.totalorder %s88, %s89
      %p101 = scmp.eq.s32.totalorder %s23, 1
      %p102 = por %p100, %p101
      %p104 = scmp.ne.s32.totalorder %s89, %s103
      %p105 = scmp.eq.s32.totalorder %s23, 0
      %p106 = por %p104, %p105
      %s108 = sadd.s32 %s107, 1
      %p111 = scmp.eq.s32.totalorder %s17, 1
      %p112 = scmp.ne.s32.totalorder %s107, %s109
      %p113 = scmp.eq.s32.totalorder %s17, 0
      %p114 = por %p112, %p113
      %p115 = scmp.ne.s32.totalorder %s107, %s109
      %p116 = scmp.eq.s32.totalorder %s22, 1
      %p117 = por %p115, %p116
      %p118 = scmp.ne.s32.totalorder %s109, %s110
      %p119 = scmp.eq.s32.totalorder %s22, 0
      %p120 = por %p118, %p119
      %p121 = scmp.ne.s32.totalorder %s109, %s110
      %p122 = scmp.eq.s32.totalorder %s23, 1
      %p123 = por %p121, %p122
      %p125 = scmp.ne.s32.totalorder %s110, %s124
      %p126 = scmp.eq.s32.totalorder %s23, 0
      %p127 = por %p125, %p126
      %s129 = sadd.s32 %s128, 1
      %p132 = scmp.eq.s32.totalorder %s17, 1
      %p133 = scmp.ne.s32.totalorder %s128, %s130
      %p134 = scmp.eq.s32.totalorder %s17, 0
      %p135 = por %p133, %p134
      %p136 = scmp.ne.s32.totalorder %s128, %s130
      %p137 = scmp.eq.s32.totalorder %s22, 1
      %p138 = por %p136, %p137
      %p139 = scmp.ne.s32.totalorder %s130, %s131
      %p140 = scmp.eq.s32.totalorder %s22, 0
      %p141 = por %p139, %p140
      %p142 = scmp.ne.s32.totalorder %s130, %s131
      %p143 = scmp.eq.s32.totalorder %s23, 1
      %p144 = por %p142, %p143
      %p146 = scmp.ne.s32.totalorder %s131, %s145
      %p147 = scmp.eq.s32.totalorder %s23, 0
      %p148 = por %p146, %p147
      %s150 = sadd.s32 %s149, 1
      %p153 = scmp.eq.s32.totalorder %s17, 1
      %p154 = scmp.ne.s32.totalorder %s149, %s151
      %p155 = scmp.eq.s32.totalorder %s17, 0
      %p156 = por %p154, %p155
      %p157 = scmp.ne.s32.totalorder %s149, %s151
      %p158 = scmp.eq.s32.totalorder %s22, 1
      %p159 = por %p157, %p158
      %p160 = scmp.ne.s32.totalorder %s151, %s152
      %p161 = scmp.eq.s32.totalorder %s22, 0
      %p162 = por %p160, %p161
      %p163 = scmp.ne.s32.totalorder %s151, %s152
      %p164 = scmp.eq.s32.totalorder %s23, 1
      %p165 = por %p163, %p164
      %p167 = scmp.ne.s32.totalorder %s152, %s166
      %p168 = scmp.eq.s32.totalorder %s23, 0
      %p169 = por %p167, %p168
      %s171 = sadd.s32 %s170, 1
      %p174 = scmp.eq.s32.totalorder %s17, 1
      %p175 = scmp.ne.s32.totalorder %s170, %s172
      %p176 = scmp.eq.s32.totalorder %s17, 0
      %p177 = por %p175, %p176
      %p178 = scmp.ne.s32.totalorder %s170, %s172
      %p179 = scmp.eq.s32.totalorder %s22, 1
      %p180 = por %p178, %p179
      %p181 = scmp.ne.s32.totalorder %s172, %s173
      %p182 = scmp.eq.s32.totalorder %s22, 0
      %p183 = por %p181, %p182
      %p184 = scmp.ne.s32.totalorder %s172, %s173
      %p185 = scmp.eq.s32.totalorder %s23, 1
      %p186 = por %p184, %p185
      %p188 = scmp.ne.s32.totalorder %s173, %s187
      %p189 = scmp.eq.s32.totalorder %s23, 0
      %p190 = por %p188, %p189
      %s192 = sadd.s32 %s191, 1
      %p195 = scmp.eq.s32.totalorder %s17, 1
      %p196 = scmp.ne.s32.totalorder %s191, %s193
      %p197 = scmp.eq.s32.totalorder %s17, 0
      %p198 = por %p196, %p197
      %p199 = scmp.ne.s32.totalorder %s191, %s193
      %p200 = scmp.eq.s32.totalorder %s22, 1
      %p201 = por %p199, %p200
      %p202 = scmp.ne.s32.totalorder %s193, %s194
      %p203 = scmp.eq.s32.totalorder %s22, 0
      %p204 = por %p202, %p203
      %p205 = scmp.ne.s32.totalorder %s193, %s194
      %p206 = scmp.eq.s32.totalorder %s23, 1
      %p207 = por %p205, %p206
      %p209 = scmp.ne.s32.totalorder %s194, %s208
      %p210 = scmp.eq.s32.totalorder %s23, 0
      %p211 = por %p209, %p210
      %s212 = ssub.s32 %s24, %s36
      %s213 = ssub.s32 %s25, %s32
      %s214 = sor.u32 %s212, %s213
      %p215 = scmp.eq.s32.totalorder %s214, 0
      %s217 = sadd.s32 %s216, 1
      %s218 = scalar_select %p215, %s216, %s217
      %p221 = pneg %p215
      %p222 = scmp.eq.s32.totalorder %s17, 1
      %p223 = por %p221, %p222
      %p224 = scmp.ne.s32.totalorder %s216, %s219
      %p225 = scmp.eq.s32.totalorder %s17, 0
      %p226 = por %p224, %p225
      %p227 = scmp.ne.s32.totalorder %s216, %s219
      %p228 = scmp.eq.s32.totalorder %s22, 1
      %p229 = por %p227, %p228
      %p230 = scmp.ne.s32.totalorder %s219, %s220
      %p231 = scmp.eq.s32.totalorder %s22, 0
      %p232 = por %p230, %p231
      %p233 = scmp.ne.s32.totalorder %s219, %s220
      %p234 = scmp.eq.s32.totalorder %s23, 1
      %p235 = por %p233, %p234
      %p237 = scmp.ne.s32.totalorder %s220, %s236
      %p238 = scmp.eq.s32.totalorder %s23, 0
      %p239 = por %p237, %p238
      %p240 = scmp.le.s32.totalorder 1, %s17
      %p241 = scmp.lt.s32.totalorder %s17, 3
      %p242 = pnand %p240, %p241
      %p243 = pneg %p242
      // Predicated region
      $region9: #{tpu_custom_call.1} parent=5 // pred_check
        _
      $region10: #{tpu_custom_call.1} parent=5 // pred_check_branch
        %245 = sbr.rel (%p242) target = $region12
      $region11: #{tpu_custom_call.1} parent=5 // pred_region
        %s246 = ssub.s32 %s17, 1
        // Predicated region
        $region13: #{tpu_custom_call.1} parent=11 // pred_check
          %p247 = pneg %p78
        $region14: #{tpu_custom_call.1} parent=11 // pred_check_branch
          %249 = sbr.rel (%p247) target = $region16
        $region15: #{tpu_custom_call.1} parent=11 // pred_region
          _
        $region16: #{tpu_custom_call.1} parent=11 // pred_fallthru
          _
        // Predicated region
        $region17: #{tpu_custom_call.1} parent=11 // pred_check
          %p250 = pneg %p99
        $region18: #{tpu_custom_call.1} parent=11 // pred_check_branch
          %252 = sbr.rel (%p250) target = $region20
        $region19: #{tpu_custom_call.1} parent=11 // pred_region
          _
        $region20: #{tpu_custom_call.1} parent=11 // pred_fallthru
          _
        // Predicated region
        $region21: #{tpu_custom_call.1} parent=11 // pred_check
          %p253 = pneg %p120
        $region22: #{tpu_custom_call.1} parent=11 // pred_check_branch
          %255 = sbr.rel (%p253) target = $region24
        $region23: #{tpu_custom_call.1} parent=11 // pred_region
          _
        $region24: #{tpu_custom_call.1} parent=11 // pred_fallthru
          _
        // Predicated region
        $region25: #{tpu_custom_call.1} parent=11 // pred_check
          %p256 = pneg %p141
        $region26: #{tpu_custom_call.1} parent=11 // pred_check_branch
          %258 = sbr.rel (%p256) target = $region28
        $region27: #{tpu_custom_call.1} parent=11 // pred_region
          _
        $region28: #{tpu_custom_call.1} parent=11 // pred_fallthru
          _
        // Predicated region
        $region29: #{tpu_custom_call.1} parent=11 // pred_check
          %p259 = pneg %p162
        $region30: #{tpu_custom_call.1} parent=11 // pred_check_branch
          %261 = sbr.rel (%p259) target = $region32
        $region31: #{tpu_custom_call.1} parent=11 // pred_region
          _
        $region32: #{tpu_custom_call.1} parent=11 // pred_fallthru
          _
        // Predicated region
        $region33: #{tpu_custom_call.1} parent=11 // pred_check
          %p262 = pneg %p183
        $region34: #{tpu_custom_call.1} parent=11 // pred_check_branch
          %264 = sbr.rel (%p262) target = $region36
        $region35: #{tpu_custom_call.1} parent=11 // pred_region
          _
        $region36: #{tpu_custom_call.1} parent=11 // pred_fallthru
          _
        // Predicated region
        $region37: #{tpu_custom_call.1} parent=11 // pred_check
          %p265 = pneg %p204
        $region38: #{tpu_custom_call.1} parent=11 // pred_check_branch
          %267 = sbr.rel (%p265) target = $region40
        $region39: #{tpu_custom_call.1} parent=11 // pred_region
          _
        $region40: #{tpu_custom_call.1} parent=11 // pred_fallthru
          _
      $region12: #{tpu_custom_call.1} parent=5 // pred_fallthru
        _
      %p268 = scmp.lt.s32.totalorder %s17, 2
      // Predicated region
      $region41: #{tpu_custom_call.1} parent=5 // pred_check
        %p269 = pneg %p268
      $region42: #{tpu_custom_call.1} parent=5 // pred_check_branch
        %271 = sbr.rel (%p269) target = $region44
      $region43: #{tpu_custom_call.1} parent=5 // pred_region
        // Predicated region
        $region45: #{tpu_custom_call.1} parent=43 // pred_check
          %p272 = pneg %p51
        $region46: #{tpu_custom_call.1} parent=43 // pred_check_branch
          %274 = sbr.rel (%p272) target = $region48
        $region47: #{tpu_custom_call.1} parent=43 // pred_region
          %p275 = scmp.lt.s32.totalorder %s24, 1
          %s276 = scalar_select %p275, %s24, 1
          %p277 = scmp.lt.s32.totalorder %s25, 0
          %s278 = scalar_select %p277, %s25, 0
          %s279 = sadd.s32 %s278, %s276
          %s280 = smul.addr %s279, 2
          %s281 = scalar_lea.vmem %s0, %s280
        $region48: #{tpu_custom_call.1} parent=43 // pred_fallthru
          _
      $region44: #{tpu_custom_call.1} parent=5 // pred_fallthru
        _
      %p282 = scmp.le.s32.totalorder 1, %s17
      %p283 = scmp.lt.s32.totalorder %s17, 3
      %p284 = pnand %p282, %p283
      %p285 = pneg %p284
      // Predicated region
      $region49: #{tpu_custom_call.1} parent=5 // pred_check
        _
      $region50: #{tpu_custom_call.1} parent=5 // pred_check_branch
        %287 = sbr.rel (%p284) target = $region52
      $region51: #{tpu_custom_call.1} parent=5 // pred_region
        %s288 = ssub.s32 %s17, 1
        %p289 = scmp.lt.s32.totalorder %s26, 1
        %s290 = scalar_select %p289, %s26, 1
        %p291 = scmp.lt.s32.totalorder %s27, 0
        %s292 = scalar_select %p291, %s27, 0
        %s293 = sadd.s32 %s292, %s290
        %s294 = smul.addr %s293, 2
        %s295 = scalar_lea.vmem %s0, %s294
        %p296 = pneg %p57
        %p297 = pneg %p54
        %p298 = pneg %p78
        %p299 = pneg %p75
        %p300 = pneg %p99
        %p301 = pneg %p96
        %p302 = pneg %p120
        %p303 = pneg %p117
        %p304 = pneg %p141
        %p305 = pneg %p138
        %p306 = pneg %p162
        %p307 = pneg %p159
        %p308 = pneg %p183
        %p309 = pneg %p180
        %p310 = pneg %p204
        %p311 = pneg %p201
        %p312 = pneg %p232
        %p313 = pneg %p229
        %s314 = sand.u32 %s219, 1
        %s315 = scalar_lea.sflag [#allocation5], %s314
        %s316 = sand.u32 %s219, 1
        %s317 = smul.addr %s316, 4
        %s318 = scalar_lea.vmem [#allocation4], %s317
        %p319 = scmp.lt.s32.totalorder %s26, 1
        %s320 = scalar_select %p319, %s26, 1
        %p321 = scmp.lt.s32.totalorder %s27, 0
        %s322 = scalar_select %p321, %s27, 0
        %s323 = sadd.s32 %s322, %s320
        %s324 = smul.addr %s323, 2
        %s325 = scalar_lea.vmem %s0, %s324
        %p327 = scmp.eq.s32.totalorder %s27, 0
        // Predicated region
        $region53: #{tpu_custom_call.1} parent=51 // pred_check
          %p328 = pneg %p327
        $region54: #{tpu_custom_call.1} parent=51 // pred_check_branch
          %330 = sbr.rel (%p328) target = $region56
        $region55: #{tpu_custom_call.1} parent=51 // pred_region
          %vm331 = vcmask 58368
          %332 = vst.msk [vmem:[#allocation2] sm:$0x3] %vm331, 0
          %vm333 = vcmask 60416
          %334 = vst.msk [vmem:[#allocation3] sm:$0xf] %vm333, 0
        $region56: #{tpu_custom_call.1} parent=51 // pred_fallthru
          _
        %v335 = vld [vmem:[%s1] sm:$0xf]
        %v336 = vld [vmem:[%s2] sm:$0xf]
        %v337 = vld [vmem:[%s4] sm:$0xff]
        %339 = vset.pattern.permute.xlu0 0
        %340 = vperm.xlu0 %339, %v337
        %v341 = vpop.permute.xlu0 %340
        %v343 = vld [vmem:[%s5] sm:$0xff]
        %345 = vset.pattern.permute.xlu0 0
        %346 = vperm.xlu0 %345, %v343
        %v347 = vpop.permute.xlu0 %346
        %v349 = vld [vmem:[%s6] sm:$0xff]
        %351 = vset.pattern.permute.xlu0 0
        %352 = vperm.xlu0 %351, %v349
        %v353 = vpop.permute.xlu0 %352
        %v355 = vld [vmem:[%s3] sm:$0xf]
        %v356 = vld [vmem:[%s7] sm:$0xff]
        %358 = vset.pattern.permute.xlu0 0
        %359 = vperm.xlu0 %358, %v356
        %v360 = vpop.permute.xlu0 %359
        %v362 = vld [vmem:[%s325] sm:$0x3]
        %v363 = vld [vmem:[#allocation2] sm:$0x3]
        %v366 = vunpack.c.l.s4 1983009808
        %v367 = vunpack.c.0.s8 %v366
        %v368 = vlaneseq
        %v369 = vshrl.u32 %v368, 7
        %v370 = vsub.s32 %v367, %v369
        %v371 = vrot.slane %v362, %v370
        %372 = vrot.lane.b32.xlu0 %v371, 8
        %v373 = vpop.permute.xlu0 %372
        %vm374 = vcmask 64512
        %v377 = vsel %vm374, %v363, %v373
        %378 = vrot.lane.b32.xlu0 %v362, 8
        %v379 = vpop.permute.xlu0 %378
        %vm381 = vcmask 58368
        %382 = vst.msk [vmem:[#allocation2] sm:$0x3] %vm381, %v379
        %v384 = vrot.slane %v377, 6
        %v385 = vrot.slane %v373, 6
        %386 = vrot.lane.b32.xlu0 %v384, 124
        %v387 = vpop.permute.xlu0 %386
        %388 = vrot.lane.b32.xlu0 %v385, 124
        %v389 = vpop.permute.xlu0 %388
        %vm390 = vcmask 1014784
        %v391 = vsel %vm390, %v387, %v389
        %v392 = vrot.slane %v377, 4
        %v393 = vrot.slane %v373, 4
        %394 = vrot.lane.b32.xlu0 %v392, 120
        %v395 = vpop.permute.xlu0 %394
        %396 = vrot.lane.b32.xlu0 %v393, 120
        %v397 = vpop.permute.xlu0 %396
        %vm398 = vcmask 982016
        %v399 = vsel %vm398, %v395, %v397
        %vm400 = vcmask 1041408
        %v402 = vsel %vm400, %v377, %v391
        %vm403 = vcmask 1043456
        %v405 = vsel %vm403, %v402, %v399
        %vm406 = vcmask 97280
        %v408 = vsel %vm406, %v335, 0
        %vm410 = vcmask 1045504
        %v411 = vsel %vm410, %v405, 0
        %413 = vmatprep.subr.bf16.mxu0 0
        %414 = vmatpush1.bf16.msra.mxu0 0
        %415 = vmatprep.subr.bf16.mxu0 0
        %416 = vmatpush1.bf16.msra.mxu0 0
        %417 = vmatprep.subr.bf16.mxu0 0
        %418 = vmatpush1.bf16.msra.mxu0 0
        %419 = vmatprep.subr.bf16.mxu0 0
        %420 = vmatpush1.bf16.msra.mxu0 0
        %421 = vmatprep.subr.bf16.mxu0 0
        %422 = vmatpush1.bf16.msra.mxu0 0
        %423 = vmatprep.subr.bf16.mxu0 0
        %424 = vmatpush1.bf16.msra.mxu0 0
        %425 = vmatprep.subr.bf16.mxu0 0
        %426 = vmatpush1.bf16.msra.mxu0 0
        %427 = vmatprep.subr.bf16.mxu0 0
        %428 = vmatpush1.bf16.msra.mxu0 %v411
        %429 = vmatprep.subr.bf16.mxu0 0
        %430 = vmatpush2.bf16.msra.mxu0 0
        %431 = vmatprep.subr.bf16.mxu0 0
        %432 = vmatpush2.bf16.msra.mxu0 0
        %433 = vmatprep.subr.bf16.mxu0 0
        %434 = vmatpush2.bf16.msra.mxu0 0
        %435 = vmatprep.subr.bf16.mxu0 0
        %436 = vmatpush2.bf16.msra.mxu0 0
        %437 = vmatprep.subr.bf16.mxu0 0
        %438 = vmatpush2.bf16.msra.mxu0 0
        %439 = vmatprep.subr.bf16.mxu0 0
        %440 = vmatpush2.bf16.msra.mxu0 0
        %441 = vmatprep.subr.bf16.mxu0 0
        %442 = vmatpush2.bf16.msra.mxu0 0
        %443 = vmatprep.subr.bf16.mxu0 0
        %444 = vmatpush2.bf16.msra.mxu0 0
        %445 = vmatprep.mubr.bf16.mxu0 0
        %446 = vmatmul.mubr.bf16.gmra.mxu0 %v408
        %v447 = vpop.f32.mrf.mxu0
        %v448 = vadd.f32 0.0, %v447
        %v449 = vpop.f32.mrf.mxu0
        %v450 = vpop.f32.mrf.mxu0
        %v451 = vpop.f32.mrf.mxu0
        %452 = vdwg.mxu0
        %v453 = vmul.f32 %v448, %v341
        %v454 = vadd.f32 %v453, %v347
        %vm455 = vcmp.gt.f32.partialorder %v454, 0.0
        %v456 = vmul.f32 %v454, 1.442695
        %v457 = vpow.pop %v456
        %v458 = vsub.f32 %v457, 1.0
        %v459 = vsel %vm455, %v454, %v458
        %v460 = vpack.c.bf16 %v459, %v459
        %v461 = vld [vmem:[#allocation3] sm:$0xf]
        %463 = vrot.lane.b32.xlu0 %v460, 8
        %v464 = vpop.permute.xlu0 %463
        %v467 = vsel %vm374, %v461, %v464
        %v468 = vunpack.c.l.b16 %v460
        %v469 = vpack.c.b16 %v468, %v468
        %470 = vrot.lane.b32.xlu0 %v469, 8
        %v471 = vpop.permute.xlu0 %470
        %vm473 = vcmask 60416
        %474 = vst.msk [vmem:[#allocation3] sm:$0xf] %vm473, %v471
        %v476 = vrot.slane %v467, 4
        %v477 = vrot.slane %v464, 4
        %478 = vrot.lane.b32.xlu0 %v476, 124
        %v479 = vpop.permute.xlu0 %478
        %480 = vrot.lane.b32.xlu0 %v477, 124
        %v481 = vpop.permute.xlu0 %480
        %v482 = vsel %vm390, %v479, %v481
        %483 = vrot.lane.b32.xlu0 %v467, 120
        %v484 = vpop.permute.xlu0 %483
        %485 = vrot.lane.b32.xlu0 %v464, 120
        %v486 = vpop.permute.xlu0 %485
        %v487 = vsel %vm398, %v484, %v486
        %v489 = vsel %vm403, %v467, %v482
        %vm491 = vcmask 195584
        %v493 = vsel %vm491, %v336, 0
        %v496 = vsel %vm403, %v487, 0
        %498 = vmatprep.subr.bf16.mxu0 0
        %499 = vmatpush1.bf16.msra.mxu0 0
        %500 = vmatprep.subr.bf16.mxu0 0
        %501 = vmatpush1.bf16.msra.mxu0 0
        %502 = vmatprep.subr.bf16.mxu0 0
        %503 = vmatpush1.bf16.msra.mxu0 0
        %504 = vmatprep.subr.bf16.mxu0 0
        %505 = vmatpush1.bf16.msra.mxu0 0
        %506 = vmatprep.subr.bf16.mxu0 0
        %507 = vmatpush1.bf16.msra.mxu0 0
        %508 = vmatprep.subr.bf16.mxu0 0
        %509 = vmatpush1.bf16.msra.mxu0 0
        %510 = vmatprep.subr.bf16.mxu0 0
        %511 = vmatpush1.bf16.msra.mxu0 %v496
        %512 = vmatprep.subr.bf16.mxu0 0
        %513 = vmatpush1.bf16.msra.mxu0 %v489
        %514 = vmatprep.subr.bf16.mxu0 0
        %515 = vmatpush2.bf16.msra.mxu0 0
        %516 = vmatprep.subr.bf16.mxu0 0
        %517 = vmatpush2.bf16.msra.mxu0 0
        %518 = vmatprep.subr.bf16.mxu0 0
        %519 = vmatpush2.bf16.msra.mxu0 0
        %520 = vmatprep.subr.bf16.mxu0 0
        %521 = vmatpush2.bf16.msra.mxu0 0
        %522 = vmatprep.subr.bf16.mxu0 0
        %523 = vmatpush2.bf16.msra.mxu0 0
        %524 = vmatprep.subr.bf16.mxu0 0
        %525 = vmatpush2.bf16.msra.mxu0 0
        %526 = vmatprep.subr.bf16.mxu0 0
        %527 = vmatpush2.bf16.msra.mxu0 0
        %528 = vmatprep.subr.bf16.mxu0 0
        %529 = vmatpush2.bf16.msra.mxu0 0
        %530 = vmatprep.mubr.bf16.mxu0 0
        %531 = vmatmul.mubr.bf16.gmra.mxu0 %v493
        %v532 = vpop.f32.mrf.mxu0
        %v533 = vadd.f32 0.0, %v532
        %v534 = vpop.f32.mrf.mxu0
        %v535 = vpop.f32.mrf.mxu0
        %v536 = vpop.f32.mrf.mxu0
        %537 = vdwg.mxu0
        %v538 = vmul.f32 %v533, %v341
        %v539 = vadd.f32 %v538, %v353
        %vm540 = vcmp.gt.f32.partialorder %v539, 0.0
        %v541 = vmul.f32 %v539, 1.442695
        %v542 = vpow.pop %v541
        %v543 = vsub.f32 %v542, 1.0
        %v544 = vsel %vm540, %v539, %v543
        %vm545 = vcmask 31744
        %v547 = vsel %vm545, %v355, 0
        %v550 = vsel %vm400, %v362, 0
        %552 = vmatprep.subr.bf16.mxu0 0
        %553 = vmatpush1.bf16.msra.mxu0 0
        %554 = vmatprep.subr.bf16.mxu0 0
        %555 = vmatpush1.bf16.msra.mxu0 0
        %556 = vmatprep.subr.bf16.mxu0 0
        %557 = vmatpush1.bf16.msra.mxu0 0
        %558 = vmatprep.subr.bf16.mxu0 0
        %559 = vmatpush1.bf16.msra.mxu0 0
        %560 = vmatprep.subr.bf16.mxu0 0
        %561 = vmatpush1.bf16.msra.mxu0 0
        %562 = vmatprep.subr.bf16.mxu0 0
        %563 = vmatpush1.bf16.msra.mxu0 0
        %564 = vmatprep.subr.bf16.mxu0 0
        %565 = vmatpush1.bf16.msra.mxu0 0
        %566 = vmatprep.subr.bf16.mxu0 0
        %567 = vmatpush1.bf16.msra.mxu0 %v550
        %568 = vmatprep.subr.bf16.mxu0 0
        %569 = vmatpush2.bf16.msra.mxu0 0
        %570 = vmatprep.subr.bf16.mxu0 0
        %571 = vmatpush2.bf16.msra.mxu0 0
        %572 = vmatprep.subr.bf16.mxu0 0
        %573 = vmatpush2.bf16.msra.mxu0 0
        %574 = vmatprep.subr.bf16.mxu0 0
        %575 = vmatpush2.bf16.msra.mxu0 0
        %576 = vmatprep.subr.bf16.mxu0 0
        %577 = vmatpush2.bf16.msra.mxu0 0
        %578 = vmatprep.subr.bf16.mxu0 0
        %579 = vmatpush2.bf16.msra.mxu0 0
        %580 = vmatprep.subr.bf16.mxu0 0
        %581 = vmatpush2.bf16.msra.mxu0 0
        %582 = vmatprep.subr.bf16.mxu0 0
        %583 = vmatpush2.bf16.msra.mxu0 0
        %584 = vmatprep.mubr.bf16.mxu0 0
        %585 = vmatmul.mubr.bf16.gmra.mxu0 %v547
        %v586 = vpop.f32.mrf.mxu0
        %v587 = vadd.f32 %v360, %v586
        %v588 = vpop.f32.mrf.mxu0
        %v589 = vpop.f32.mrf.mxu0
        %v590 = vpop.f32.mrf.mxu0
        %591 = vdwg.mxu0
        %v592 = vadd.f32 %v544, %v587
        %vm593 = vcmp.gt.f32.partialorder %v592, 0.0
        %v594 = vmul.f32 %v592, 1.442695
        %v595 = vpow.pop %v594
        %v596 = vsub.f32 %v595, 1.0
        %v597 = vsel %vm593, %v592, %v596
        %v598 = vpack.c.bf16 %v597, %v597
        %599 = vst [vmem:[%s318] sm:$0xf] %v598
        %s600 = sand.u32 %s219, 1
        %s601 = scalar_lea.sflag [#allocation5], %s600
        %s602 = sand.u32 %s219, 1
        %s603 = smul.addr %s602, 4
        %s604 = scalar_lea.vmem [#allocation4], %s603
        // Predicated region
        $region57: #{tpu_custom_call.1} parent=51 // pred_check
          %p605 = pneg %p229
        $region58: #{tpu_custom_call.1} parent=51 // pred_check_branch
          %607 = sbr.rel (%p605) target = $region60
        $region59: #{tpu_custom_call.1} parent=51 // pred_region
          %s609 = ssub.s32 64, 64
          %610 = vsyncadd %s601, %s609
          %s611 = sadd.s32 %s27, %s26
          %s612 = smul.addr %s611, 64
          %s613 = scalar_lea.hbm %s8, %s612
          %s615 = sshll.u32 %s604, 4
          %s616 = int_to_ptr.vmem [resolvable:$true] %s615
          %618 = dma.vmem_to_hbm [thread:$0]  %s616, 64, %s613, %s601
        $region60: #{tpu_custom_call.1} parent=51 // pred_fallthru
          _
      $region52: #{tpu_custom_call.1} parent=5 // pred_fallthru
        _
      %p619 = scmp.le.s32.totalorder 2, %s17
      // Predicated region
      $region61: #{tpu_custom_call.1} parent=5 // pred_check
        %p620 = pneg %p619
      $region62: #{tpu_custom_call.1} parent=5 // pred_check_branch
        %622 = sbr.rel (%p620) target = $region64
      $region63: #{tpu_custom_call.1} parent=5 // pred_region
        %s623 = ssub.s32 %s17, 2
        // Predicated region
        $region65: #{tpu_custom_call.1} parent=63 // pred_check
          %p624 = pneg %p235
        $region66: #{tpu_custom_call.1} parent=63 // pred_check_branch
          %626 = sbr.rel (%p624) target = $region68
        $region67: #{tpu_custom_call.1} parent=63 // pred_region
          %s627 = sand.u32 %s220, 1
          %s628 = scalar_lea.sflag [#allocation5], %s627
          %s629 = sand.u32 %s220, 1
          %s630 = smul.addr %s629, 4
          %s631 = scalar_lea.vmem [#allocation4], %s630
          %632 = dma.done %s628, 64
        $region68: #{tpu_custom_call.1} parent=63 // pred_fallthru
          _
      $region64: #{tpu_custom_call.1} parent=5 // pred_fallthru
        _
    $region6: #{tpu_custom_call.1} parent=1 // loop_footer
      %s21 = sadd.s32 1, %s17
    $region7: #{tpu_custom_call.1} parent=1 // loop_footer_branch
      %16 = sbr.rel target = $region3
    $region8: #{tpu_custom_call.1} parent=1 // loop_exit
      _
    %633 = vsyncpa [#allocation5], 1
    %s634 = scalar_lea.sflag [#allocation5], 1
    %635 = vsyncpa %s634, 1

</llo_original>
